<compile_context>
chip_gen: v7x
topology: tpu7x:2x2x1
jax: 0.10.0
libtpu: 0.0.40
codegen_flags: <defaults>
</compile_context>

<pallas_src>
import math

import jax
import jax.numpy as jnp
from jax.experimental import pallas as pl
from jax.experimental.pallas import tpu as pltpu


def _cdiv(a, b):
    return (a + b - 1) // b


def _round_up(a, b):
    return _cdiv(a, b) * b


def time2vec_kernel(x_ref, repw_ref, par_ref, o_ref):
    # x_ref:    (tm, G*D)     packed input rows (G original rows per packed row)
    # repw_ref: (G*D, G*D*E)  block-diag replication-with-weight matrix:
    #                         repw[(g,d), (g,d,e)] = W[d,e], 0 elsewhere
    # par_ref:  (2, G*D*E)    row0 = bias slab, row1 = linear-column mask
    # o_ref:    (tm, G*D*E)   lane-dense output (multiple of 128 lanes)
    aff = jnp.dot(x_ref[...], repw_ref[...],
                  preferred_element_type=jnp.float32,
                  precision=jax.lax.Precision.HIGHEST)
    aff = aff + par_ref[0:1, :]
    # Column e == 0 of every feature stays linear; the rest go through sin.
    # Implicit broadcast of the (1, GF) predicate — no broadcast_to needed.
    o_ref[...] = jnp.where(par_ref[1:2, :] > 0.5, aff, jnp.sin(aff))


def time2vec(x, w, b, *, vmem_budget_bytes=8 * 1024 * 1024):
    """x: (B, T, D) float32; w, b: (D, E) float32 -> (B, T, D*E) float32."""
    B, T, D = x.shape
    E = w.shape[1]
    F = D * E
    N = B * T

    # Pack G consecutive rows per output row so the output last dim (G*F) is a
    # multiple of 128 lanes -> every store is an unmasked full-width vst.
    G = 128 // math.gcd(F, 128)
    GF = G * F
    GD = G * D

    # --- Tile sizing (VMEM-aware, lane-padding-aware). ---
    # Per packed row, per pipeline buffer:
    #   x block : G*D lanes, lane-padded up to a multiple of 128 in VMEM
    #   out block: GF lanes (already a multiple of 128)
    # Both are double-buffered by the BlockSpec pipeline; rep_w / params blocks
    # are grid-invariant and tiny.  The 8 MiB default budget keeps the true
    # footprint well inside v5e's 16 MiB scoped default and v7x's 32 MiB.
    row_bytes = (_round_up(GD, 128) + GF) * 4
    tm_max = max(8, (vmem_budget_bytes // (2 * row_bytes)) // 8 * 8)

    ng = _cdiv(N, G)                      # packed rows of real data
    nt = _cdiv(ng, tm_max)                # grid steps needed for VMEM fit
    if ng >= 16:
        nt = max(nt, 2)                   # >= 2 steps so v7x can use both TCs
    tm = _round_up(_cdiv(ng, nt), 8)      # rows/tile sized for minimal tail pad
    ng_pad = nt * tm
    n_pad = ng_pad * G

    x2 = x.reshape(N, D).astype(jnp.float32)
    if n_pad != N:
        # Ragged tail: at most ~8 padded packed rows per tile (cheap; x is the
        # small operand).  The aligned case skips this copy entirely.
        x2 = jnp.pad(x2, ((0, n_pad - N), (0, 0)))
    x_packed = x2.reshape(ng_pad, GD)     # contiguous -> free when unpadded

    # Replication-with-weight matrix: input feature (g, d) feeds output lanes
    # (g, d, e) with value W[d, e]; zero elsewhere (block-diagonal).  Folding W
    # here lets the MXU do the multiply for free.
    row = jnp.arange(GD)                  # packed input index  = g*D + d
    col = jnp.arange(GF)                  # packed output index = g*F + d*E + e
    same_g = (row[:, None] // D) == (col[None, :] // F)
    same_d = (row[:, None] % D) == ((col[None, :] % F) // E)
    w_col = jnp.tile(w.reshape(-1).astype(jnp.float32), G)     # W[d,e] per lane
    rep_w = jnp.where(same_g & same_d, w_col[None, :], 0.0)    # (GD, GF)

    # Parameter slab: bias (tiled G times) + linear-column (e == 0) mask.
    b_slab = jnp.tile(b.reshape(-1).astype(jnp.float32), G)
    lin_mask = ((col % E) == 0).astype(jnp.float32)
    params = jnp.stack([b_slab, lin_mask], axis=0)              # (2, GF)

    out = pl.pallas_call(
        time2vec_kernel,
        out_shape=jax.ShapeDtypeStruct((ng_pad, GF), jnp.float32),
        grid_spec=pl.GridSpec(
            grid=(nt,),
            in_specs=[
                pl.BlockSpec((tm, GD), lambda i: (i, 0)),
                pl.BlockSpec((GD, GF), lambda i: (0, 0)),   # grid-invariant
                pl.BlockSpec((2, GF), lambda i: (0, 0)),    # grid-invariant
            ],
            out_specs=pl.BlockSpec((tm, GF), lambda i: (i, 0)),
        ),
        compiler_params=pltpu.CompilerParams(
            dimension_semantics=("parallel",)),
    )(x_packed, rep_w, params)

    if n_pad == N:
        return out.reshape(B, T, F)       # free bitcast: no padded rows
    return out.reshape(n_pad, F)[:N].reshape(B, T, F)


def time2vec_ref(x, w, b):
    """Pure-JAX reference mirroring the PyTorch forward."""
    aff = x[..., :, None] * w + b                      # (B, T, D, E)
    out = jnp.concatenate([aff[..., :1], jnp.sin(aff[..., 1:])], axis=-1)
    return out.reshape(x.shape[0], x.shape[1], -1)


if __name__ == "__main__":
    # Module config (small): input_dim=4, embed_dim=32 -> per-feature E=8
    input_dim, embed_dim = 4, 32
    E = embed_dim // input_dim
    B, T = 2, 8

    key = jax.random.PRNGKey(0)
    kx, kw, kb = jax.random.split(key, 3)
    x = jax.random.normal(kx, (B, T, input_dim), dtype=jnp.float32)
    embed_weight = jax.random.normal(kw, (input_dim, E), dtype=jnp.float32)
    embed_bias = jax.random.normal(kb, (input_dim, E), dtype=jnp.float32)

    out = time2vec(x, embed_weight, embed_bias)
    out = jax.block_until_ready(out)

    ref = time2vec_ref(x, embed_weight, embed_bias)
    assert out.shape == (B, T, embed_dim), out.shape
    assert jnp.allclose(out, ref, atol=1e-5, rtol=1e-5), "mismatch vs reference"

    print("KERNEL_OK")
</pallas_src>

<mosaic_0001>
module attributes {stable_mosaic.version = 11 : i64} {
  func.func @time2vec_kernel(%arg0: i32, %arg1: memref<8x16xf32, #tpu.memory_space<vmem>>, %arg2: memref<16x128xf32, #tpu.memory_space<vmem>>, %arg3: memref<2x128xf32, #tpu.memory_space<vmem>>, %arg4: memref<8x128xf32, #tpu.memory_space<vmem>>) attributes {dimension_semantics = [#tpu.dimension_semantics<parallel>], iteration_bounds = array<i64: 1>, scalar_prefetch = 0 : i64, scratch_operands = 0 : i64, tpu.core_type = #tpu.core_type<tc>, window_params = [{transform_indices = @transform_0, window_bounds = array<i64: 8, 16>}, {pipeline_mode = #tpu.pipeline_mode<synchronous>, transform_indices = @transform_1, window_bounds = array<i64: 16, 128>}, {pipeline_mode = #tpu.pipeline_mode<synchronous>, transform_indices = @transform_2, window_bounds = array<i64: 2, 128>}, {transform_indices = @transform_3, window_bounds = array<i64: 8, 128>}]} {
    %c0 = arith.constant 0 : index
    %c0_0 = arith.constant 0 : index
    %0 = vector.load %arg1[%c0, %c0_0] : memref<8x16xf32, #tpu.memory_space<vmem>>, vector<8x16xf32>
    %c0_1 = arith.constant 0 : index
    %c0_2 = arith.constant 0 : index
    %1 = vector.load %arg2[%c0_1, %c0_2] : memref<16x128xf32, #tpu.memory_space<vmem>>, vector<16x128xf32>
    %cst = arith.constant dense<0.000000e+00> : vector<8x128xf32>
    %2 = tpu.matmul %0, %1, %cst {dimension_numbers = #tpu.dot_dimension_numbers<[1], [0], [0], [1], [0, 0, 1, 1], [], []>, precision = #tpu.contract_precision<fp32>} : vector<8x16xf32>, vector<16x128xf32>, vector<8x128xf32> -> vector<8x128xf32>
    %c0_3 = arith.constant 0 : index
    %c0_4 = arith.constant 0 : index
    %3 = vector.load %arg3[%c0_3, %c0_4] : memref<2x128xf32, #tpu.memory_space<vmem>>, vector<1x128xf32>
    %4 = vector.broadcast %3 : vector<1x128xf32> to vector<8x128xf32>
    %5 = arith.addf %2, %4 : vector<8x128xf32>
    %c1 = arith.constant 1 : index
    %c0_5 = arith.constant 0 : index
    %6 = vector.load %arg3[%c1, %c0_5] : memref<2x128xf32, #tpu.memory_space<vmem>>, vector<1x128xf32>
    %cst_6 = arith.constant 5.000000e-01 : f32
    %7 = vector.broadcast %cst_6 : f32 to vector<1x128xf32>
    %8 = arith.cmpf ogt, %6, %7 : vector<1x128xf32>
    %9 = math.sin %5 : vector<8x128xf32>
    %10 = vector.shape_cast %8 : vector<1x128xi1> to vector<1x128xi1>
    %11 = vector.broadcast %10 : vector<1x128xi1> to vector<8x128xi1>
    %12 = arith.select %11, %5, %9 : vector<8x128xi1>, vector<8x128xf32>
    %c0_7 = arith.constant 0 : index
    %c0_8 = arith.constant 0 : index
    %13 = vector.load %arg4[%c0_7, %c0_8] : memref<8x128xf32, #tpu.memory_space<vmem>>, vector<8x128xf32>
    tpu.vector_store %arg4[%c0_7, %c0_8], %12 {strides = array<i32>} : memref<8x128xf32, #tpu.memory_space<vmem>>, vector<8x128xf32>,
    return
  }
  func.func @transform_0(%arg0: i32) -> (i32, i32) {
    %c0_i32 = arith.constant 0 : i32
    %c0_i32_0 = arith.constant 0 : i32
    return %arg0, %c0_i32 : i32, i32
  }
  func.func @transform_1(%arg0: i32) -> (i32, i32) {
    %c0_i32 = arith.constant 0 : i32
    %c0_i32_0 = arith.constant 0 : i32
    %c0_i32_1 = arith.constant 0 : i32
    return %c0_i32, %c0_i32_0 : i32, i32
  }
  func.func @transform_2(%arg0: i32) -> (i32, i32) {
    %c0_i32 = arith.constant 0 : i32
    %c0_i32_0 = arith.constant 0 : i32
    %c0_i32_1 = arith.constant 0 : i32
    return %c0_i32, %c0_i32_0 : i32, i32
  }
  func.func @transform_3(%arg0: i32) -> (i32, i32) {
    %c0_i32 = arith.constant 0 : i32
    %c0_i32_0 = arith.constant 0 : i32
    return %arg0, %c0_i32 : i32, i32
  }
}

</mosaic_0001>

<llo_original>
// kernel: tpu_custom_call.1
$region0: #{tpu_custom_call.1}
  #allocation0 [shape = 'u32[]', space=smem, size = 0x4, offset = 0x4, fixed_abs, tag = 'smem constant byte address 0x4 - core index']
  #allocation1 [shape = 'u32[144,128]{1,0:T(1,128)}', space=vmem, size = 0x12000, scoped, tag = 'internal scratch']
  %s0 = inlined_call_operand.hbm [shape: f32[8,16], index: 0, kind: input, shape index: {}]
  %s1 = inlined_call_operand.hbm [shape: f32[16,128], index: 1, kind: input, shape index: {}]
  %s2 = inlined_call_operand.vmem [shape: f32[2,128], index: 2, kind: input, shape index: {}]
  %s3 = inlined_call_operand.hbm [shape: f32[8,128], index: 3, kind: output, shape index: {}]
  %s4 = sld [smem:[#allocation0]]
  $region30: #{tpu_custom_call.1} parent=0
    _
  %s6 = ssub.s32 1, %s4
  %s7 = scalar_select 0, %s6, %s4
  $region1: #{tpu_custom_call.1} parent=0
    #allocation2 [shape = 'u8[4096]{0}', space=vmem, size = 0x1000, scoped, tag = 'input window, operand 0, single buffered']
    #allocation3 [shape = 's32[1]{0}', space=sflag, size = 0x4, scoped, tag = 'scoped memory for tpu_custom_call.1']
    #allocation4 [shape = 's32[1]{0}', space=sflag, size = 0x4, scoped, tag = 'scoped memory for tpu_custom_call.1']
    #allocation5 [shape = 'u8[8192]{0}', space=vmem, size = 0x2000, scoped, tag = 'input window, operand 1, single buffered']
    #allocation6 [shape = 's32[1]{0}', space=sflag, size = 0x4, scoped, tag = 'scoped memory for tpu_custom_call.1']
    #allocation7 [shape = 'u8[4096]{0}', space=vmem, size = 0x1000, scoped, tag = 'output window, operand 0, single buffered']
    %8 = vsyncpa [#allocation3], 0
    %9 = vsyncpa [#allocation6], 0
    %10 = vsyncpa [#allocation4], 0
    // Predicated region
    $region2: #{tpu_custom_call.1} parent=1 // pred_check
      _
    $region3: #{tpu_custom_call.1} parent=1 // pred_check_branch
      %12 = sbr.rel (0) target = $region5
    $region4: #{tpu_custom_call.1} parent=1 // pred_region
      %s14 = ssub.s32 128, 128
      %15 = vsyncadd [#allocation3], %s14
      %s17 = sshll.u32 [#allocation2], 4
      %s18 = int_to_ptr.vmem [resolvable:$true] %s17
      %20 = dma.hbm_to_vmem [thread:$0]  %s0, 128, %s18, [#allocation3]
    $region5: #{tpu_custom_call.1} parent=1 // pred_fallthru
      _
    // Predicated region
    $region6: #{tpu_custom_call.1} parent=1 // pred_check
      _
    $region7: #{tpu_custom_call.1} parent=1 // pred_check_branch
      %22 = sbr.rel (0) target = $region9
    $region8: #{tpu_custom_call.1} parent=1 // pred_region
      %s24 = ssub.s32 256, 256
      %25 = vsyncadd [#allocation6], %s24
      %s26 = sshll.u32 [#allocation5], 4
      %s27 = int_to_ptr.vmem [resolvable:$true] %s26
      %32 = dma.hbm_to_vmem [thread:$0]  %s1, 256, %s27, [#allocation6], 128, 128, 8
    $region9: #{tpu_custom_call.1} parent=1 // pred_fallthru
      _
    // Predicated region
    $region10: #{tpu_custom_call.1} parent=1 // pred_check
      _
    $region11: #{tpu_custom_call.1} parent=1 // pred_check_branch
      %34 = sbr.rel (0) target = $region13
    $region12: #{tpu_custom_call.1} parent=1 // pred_region
      _
    $region13: #{tpu_custom_call.1} parent=1 // pred_fallthru
      _
    // Predicated region
    $region14: #{tpu_custom_call.1} parent=1 // pred_check
      _
    $region15: #{tpu_custom_call.1} parent=1 // pred_check_branch
      %36 = sbr.rel (0) target = $region17
    $region16: #{tpu_custom_call.1} parent=1 // pred_region
      %37 = dma.done [#allocation3], 128
    $region17: #{tpu_custom_call.1} parent=1 // pred_fallthru
      _
    // Predicated region
    $region18: #{tpu_custom_call.1} parent=1 // pred_check
      _
    $region19: #{tpu_custom_call.1} parent=1 // pred_check_branch
      %39 = sbr.rel (0) target = $region21
    $region20: #{tpu_custom_call.1} parent=1 // pred_region
      %40 = dma.done [#allocation6], 256
    $region21: #{tpu_custom_call.1} parent=1 // pred_fallthru
      _
    %v41 = vld [vmem:[#allocation2] sm:$0xff]
    %v42 = vld [vmem:[#allocation5] sm:$0xff]
    %v43 = vld [vmem:[#allocation5 + $0x8] sm:$0xff]
    %v44 = vld [vmem:[%s2] sm:$0x1]
    %v45 = vlaneseq
    %v46 = vshrl.u32 %v45, 7
    %v47 = vsub.s32 0, %v46
    %v48 = vrot.slane %v44, %v47
    %vm49 = vcmask 130048
    %v51 = vsel %vm49, %v41, 0
    %53 = vmatprep.subr.mxu0 0.0
    %v54 = vand.u32 %v42, 4294901760
    %55 = vmatpush1.msra.mxu0 %v54
    %56 = vmatprep.subr.mxu0 0.0
    %v57 = vand.u32 %v43, 4294901760
    %58 = vmatpush1.msra.mxu0 %v57
    %59 = vmatprep.subr.mxu0 0.0
    %60 = vmatpush1.msra.mxu0 0.0
    %61 = vmatprep.subr.mxu0 0.0
    %62 = vmatpush1.msra.mxu0 0.0
    %63 = vmatprep.subr.mxu0 0.0
    %64 = vmatpush1.msra.mxu0 0.0
    %65 = vmatprep.subr.mxu0 0.0
    %66 = vmatpush1.msra.mxu0 0.0
    %67 = vmatprep.subr.mxu0 0.0
    %68 = vmatpush1.msra.mxu0 0.0
    %69 = vmatprep.subr.mxu0 0.0
    %70 = vmatpush1.msra.mxu0 0.0
    %71 = vmatprep.subr.mxu0 0.0
    %72 = vmatpush1.msra.mxu0 0.0
    %73 = vmatprep.subr.mxu0 0.0
    %74 = vmatpush1.msra.mxu0 0.0
    %75 = vmatprep.subr.mxu0 0.0
    %76 = vmatpush1.msra.mxu0 0.0
    %77 = vmatprep.subr.mxu0 0.0
    %78 = vmatpush1.msra.mxu0 0.0
    %79 = vmatprep.subr.mxu0 0.0
    %80 = vmatpush1.msra.mxu0 0.0
    %81 = vmatprep.subr.mxu0 0.0
    %82 = vmatpush1.msra.mxu0 0.0
    %83 = vmatprep.subr.mxu0 0.0
    %84 = vmatpush1.msra.mxu0 0.0
    %85 = vmatprep.subr.mxu0 0.0
    %86 = vmatpush1.msra.mxu0 0.0
    %87 = vmatprep.subr.mxu0 0.0
    %88 = vmatpush1.msra.mxu0 0.0
    %89 = vmatprep.subr.mxu0 0.0
    %90 = vmatpush1.msra.mxu0 0.0
    %91 = vmatprep.subr.mxu0 0.0
    %92 = vmatpush1.msra.mxu0 0.0
    %93 = vmatprep.subr.mxu0 0.0
    %94 = vmatpush1.msra.mxu0 0.0
    %95 = vmatprep.subr.mxu0 0.0
    %96 = vmatpush1.msra.mxu0 0.0
    %97 = vmatprep.subr.mxu0 0.0
    %98 = vmatpush1.msra.mxu0 0.0
    %99 = vmatprep.subr.mxu0 0.0
    %100 = vmatpush1.msra.mxu0 0.0
    %101 = vmatprep.subr.mxu0 0.0
    %102 = vmatpush1.msra.mxu0 0.0
    %103 = vmatprep.subr.mxu0 0.0
    %104 = vmatpush1.msra.mxu0 0.0
    %105 = vmatprep.subr.mxu0 0.0
    %106 = vmatpush1.msra.mxu0 0.0
    %107 = vmatprep.subr.mxu0 0.0
    %108 = vmatpush1.msra.mxu0 0.0
    %109 = vmatprep.subr.mxu0 0.0
    %110 = vmatpush1.msra.mxu0 0.0
    %111 = vmatprep.subr.mxu0 0.0
    %112 = vmatpush1.msra.mxu0 0.0
    %113 = vmatprep.subr.mxu0 0.0
    %114 = vmatpush1.msra.mxu0 0.0
    %115 = vmatprep.subr.mxu0 0.0
    %116 = vmatpush1.msra.mxu0 0.0
    %117 = vmatprep.subr.mxu0 0.0
    %118 = vmatpush1.msra.mxu0 0.0
    %119 = vmatprep.mubr.f32.mxu0 0.0
    %v120 = vand.u32 %v51, 4294901760
    %v121 = vsub.f32 %v51, %v120
    %v122 = vand.u32 %v121, 4294901760
    %v123 = vsub.f32 %v121, %v122
    %v124 = vand.u32 %v123, 4294901760
    %125 = vmatmul.mubr.f32.gmra.mrb[0].mxu0 %v124
    %v126 = vpop.f32.mrb[0].mxu0
    %v127 = vadd.f32 %v48, %v126
    %v128 = vpop.f32.mrb[0].mxu0
    %129 = vdwg.mxu0
    %130 = vmatprep.subr.mxu0 0.0
    %v131 = vand.u32 %v42, 4294901760
    %v132 = vsub.f32 %v42, %v131
    %v133 = vand.u32 %v132, 4294901760
    %v134 = vsub.f32 %v132, %v133
    %v135 = vand.u32 %v134, 4294901760
    %136 = vmatpush1.msra.mxu0 %v135
    %137 = vmatprep.subr.mxu0 0.0
    %v138 = vand.u32 %v43, 4294901760
    %v139 = vsub.f32 %v43, %v138
    %v140 = vand.u32 %v139, 4294901760
    %v141 = vsub.f32 %v139, %v140
    %v142 = vand.u32 %v141, 4294901760
    %143 = vmatpush1.msra.mxu0 %v142
    %144 = vmatprep.subr.mxu0 0.0
    %145 = vmatpush1.msra.mxu0 0.0
    %146 = vmatprep.subr.mxu0 0.0
    %147 = vmatpush1.msra.mxu0 0.0
    %148 = vmatprep.subr.mxu0 0.0
    %149 = vmatpush1.msra.mxu0 0.0
    %150 = vmatprep.subr.mxu0 0.0
    %151 = vmatpush1.msra.mxu0 0.0
    %152 = vmatprep.subr.mxu0 0.0
    %153 = vmatpush1.msra.mxu0 0.0
    %154 = vmatprep.subr.mxu0 0.0
    %155 = vmatpush1.msra.mxu0 0.0
    %156 = vmatprep.subr.mxu0 0.0
    %157 = vmatpush1.msra.mxu0 0.0
    %158 = vmatprep.subr.mxu0 0.0
    %159 = vmatpush1.msra.mxu0 0.0
    %160 = vmatprep.subr.mxu0 0.0
    %161 = vmatpush1.msra.mxu0 0.0
    %162 = vmatprep.subr.mxu0 0.0
    %163 = vmatpush1.msra.mxu0 0.0
    %164 = vmatprep.subr.mxu0 0.0
    %165 = vmatpush1.msra.mxu0 0.0
    %166 = vmatprep.subr.mxu0 0.0
    %167 = vmatpush1.msra.mxu0 0.0
    %168 = vmatprep.subr.mxu0 0.0
    %169 = vmatpush1.msra.mxu0 0.0
    %170 = vmatprep.subr.mxu0 0.0
    %171 = vmatpush1.msra.mxu0 0.0
    %172 = vmatprep.subr.mxu0 0.0
    %173 = vmatpush1.msra.mxu0 0.0
    %174 = vmatprep.subr.mxu0 0.0
    %175 = vmatpush1.msra.mxu0 0.0
    %176 = vmatprep.subr.mxu0 0.0
    %177 = vmatpush1.msra.mxu0 0.0
    %178 = vmatprep.subr.mxu0 0.0
    %179 = vmatpush1.msra.mxu0 0.0
    %180 = vmatprep.subr.mxu0 0.0
    %181 = vmatpush1.msra.mxu0 0.0
    %182 = vmatprep.subr.mxu0 0.0
    %183 = vmatpush1.msra.mxu0 0.0
    %184 = vmatprep.subr.mxu0 0.0
    %185 = vmatpush1.msra.mxu0 0.0
    %186 = vmatprep.subr.mxu0 0.0
    %187 = vmatpush1.msra.mxu0 0.0
    %188 = vmatprep.subr.mxu0 0.0
    %189 = vmatpush1.msra.mxu0 0.0
    %190 = vmatprep.subr.mxu0 0.0
    %191 = vmatpush1.msra.mxu0 0.0
    %192 = vmatprep.subr.mxu0 0.0
    %193 = vmatpush1.msra.mxu0 0.0
    %194 = vmatprep.subr.mxu0 0.0
    %195 = vmatpush1.msra.mxu0 0.0
    %196 = vmatprep.subr.mxu0 0.0
    %197 = vmatpush1.msra.mxu0 0.0
    %198 = vmatprep.subr.mxu0 0.0
    %199 = vmatpush1.msra.mxu0 0.0
    %200 = vmatprep.subr.mxu0 0.0
    %201 = vmatpush1.msra.mxu0 0.0
    %202 = vmatprep.subr.mxu0 0.0
    %203 = vmatpush1.msra.mxu0 0.0
    %204 = vmatprep.mubr.f32.mxu0 0.0
    %v205 = vand.u32 %v51, 4294901760
    %206 = vmatmul.mubr.f32.gmra.mrb[0].mxu0 %v205
    %v207 = vpop.f32.mrb[0].mxu0
    %v208 = vadd.f32 %v127, %v207
    %v209 = vpop.f32.mrb[0].mxu0
    %210 = vdwg.mxu0
    %211 = vmatprep.subr.mxu0 0.0
    %v212 = vand.u32 %v42, 4294901760
    %v213 = vsub.f32 %v42, %v212
    %214 = vmatpush1.msra.mxu0 %v213
    %215 = vmatprep.subr.mxu0 0.0
    %v216 = vand.u32 %v43, 4294901760
    %v217 = vsub.f32 %v43, %v216
    %218 = vmatpush1.msra.mxu0 %v217
    %219 = vmatprep.subr.mxu0 0.0
    %220 = vmatpush1.msra.mxu0 0.0
    %221 = vmatprep.subr.mxu0 0.0
    %222 = vmatpush1.msra.mxu0 0.0
    %223 = vmatprep.subr.mxu0 0.0
    %224 = vmatpush1.msra.mxu0 0.0
    %225 = vmatprep.subr.mxu0 0.0
    %226 = vmatpush1.msra.mxu0 0.0
    %227 = vmatprep.subr.mxu0 0.0
    %228 = vmatpush1.msra.mxu0 0.0
    %229 = vmatprep.subr.mxu0 0.0
    %230 = vmatpush1.msra.mxu0 0.0
    %231 = vmatprep.subr.mxu0 0.0
    %232 = vmatpush1.msra.mxu0 0.0
    %233 = vmatprep.subr.mxu0 0.0
    %234 = vmatpush1.msra.mxu0 0.0
    %235 = vmatprep.subr.mxu0 0.0
    %236 = vmatpush1.msra.mxu0 0.0
    %237 = vmatprep.subr.mxu0 0.0
    %238 = vmatpush1.msra.mxu0 0.0
    %239 = vmatprep.subr.mxu0 0.0
    %240 = vmatpush1.msra.mxu0 0.0
    %241 = vmatprep.subr.mxu0 0.0
    %242 = vmatpush1.msra.mxu0 0.0
    %243 = vmatprep.subr.mxu0 0.0
    %244 = vmatpush1.msra.mxu0 0.0
    %245 = vmatprep.subr.mxu0 0.0
    %246 = vmatpush1.msra.mxu0 0.0
    %247 = vmatprep.subr.mxu0 0.0
    %248 = vmatpush1.msra.mxu0 0.0
    %249 = vmatprep.subr.mxu0 0.0
    %250 = vmatpush1.msra.mxu0 0.0
    %251 = vmatprep.subr.mxu0 0.0
    %252 = vmatpush1.msra.mxu0 0.0
    %253 = vmatprep.subr.mxu0 0.0
    %254 = vmatpush1.msra.mxu0 0.0
    %255 = vmatprep.subr.mxu0 0.0
    %256 = vmatpush1.msra.mxu0 0.0
    %257 = vmatprep.subr.mxu0 0.0
    %258 = vmatpush1.msra.mxu0 0.0
    %259 = vmatprep.subr.mxu0 0.0
    %260 = vmatpush1.msra.mxu0 0.0
    %261 = vmatprep.subr.mxu0 0.0
    %262 = vmatpush1.msra.mxu0 0.0
    %263 = vmatprep.subr.mxu0 0.0
    %264 = vmatpush1.msra.mxu0 0.0
    %265 = vmatprep.subr.mxu0 0.0
    %266 = vmatpush1.msra.mxu0 0.0
    %267 = vmatprep.subr.mxu0 0.0
    %268 = vmatpush1.msra.mxu0 0.0
    %269 = vmatprep.subr.mxu0 0.0
    %270 = vmatpush1.msra.mxu0 0.0
    %271 = vmatprep.subr.mxu0 0.0
    %272 = vmatpush1.msra.mxu0 0.0
    %273 = vmatprep.subr.mxu0 0.0
    %274 = vmatpush1.msra.mxu0 0.0
    %275 = vmatprep.subr.mxu0 0.0
    %276 = vmatpush1.msra.mxu0 0.0
    %277 = vmatprep.subr.mxu0 0.0
    %278 = vmatpush1.msra.mxu0 0.0
    %279 = vmatprep.mubr.f32.mxu0 0.0
    %v280 = vand.u32 %v51, 4294901760
    %v281 = vsub.f32 %v51, %v280
    %282 = vmatmul.mubr.f32.gmra.mrb[0].mxu0 %v281
    %v283 = vpop.f32.mrb[0].mxu0
    %v284 = vadd.f32 %v208, %v283
    %v285 = vpop.f32.mrb[0].mxu0
    %286 = vdwg.mxu0
    %287 = vmatprep.subr.mxu0 0.0
    %v288 = vand.u32 %v42, 4294901760
    %289 = vmatpush1.msra.mxu0 %v288
    %290 = vmatprep.subr.mxu0 0.0
    %v291 = vand.u32 %v43, 4294901760
    %292 = vmatpush1.msra.mxu0 %v291
    %293 = vmatprep.subr.mxu0 0.0
    %294 = vmatpush1.msra.mxu0 0.0
    %295 = vmatprep.subr.mxu0 0.0
    %296 = vmatpush1.msra.mxu0 0.0
    %297 = vmatprep.subr.mxu0 0.0
    %298 = vmatpush1.msra.mxu0 0.0
    %299 = vmatprep.subr.mxu0 0.0
    %300 = vmatpush1.msra.mxu0 0.0
    %301 = vmatprep.subr.mxu0 0.0
    %302 = vmatpush1.msra.mxu0 0.0
    %303 = vmatprep.subr.mxu0 0.0
    %304 = vmatpush1.msra.mxu0 0.0
    %305 = vmatprep.subr.mxu0 0.0
    %306 = vmatpush1.msra.mxu0 0.0
    %307 = vmatprep.subr.mxu0 0.0
    %308 = vmatpush1.msra.mxu0 0.0
    %309 = vmatprep.subr.mxu0 0.0
    %310 = vmatpush1.msra.mxu0 0.0
    %311 = vmatprep.subr.mxu0 0.0
    %312 = vmatpush1.msra.mxu0 0.0
    %313 = vmatprep.subr.mxu0 0.0
    %314 = vmatpush1.msra.mxu0 0.0
    %315 = vmatprep.subr.mxu0 0.0
    %316 = vmatpush1.msra.mxu0 0.0
    %317 = vmatprep.subr.mxu0 0.0
    %318 = vmatpush1.msra.mxu0 0.0
    %319 = vmatprep.subr.mxu0 0.0
    %320 = vmatpush1.msra.mxu0 0.0
    %321 = vmatprep.subr.mxu0 0.0
    %322 = vmatpush1.msra.mxu0 0.0
    %323 = vmatprep.subr.mxu0 0.0
    %324 = vmatpush1.msra.mxu0 0.0
    %325 = vmatprep.subr.mxu0 0.0
    %326 = vmatpush1.msra.mxu0 0.0
    %327 = vmatprep.subr.mxu0 0.0
    %328 = vmatpush1.msra.mxu0 0.0
    %329 = vmatprep.subr.mxu0 0.0
    %330 = vmatpush1.msra.mxu0 0.0
    %331 = vmatprep.subr.mxu0 0.0
    %332 = vmatpush1.msra.mxu0 0.0
    %333 = vmatprep.subr.mxu0 0.0
    %334 = vmatpush1.msra.mxu0 0.0
    %335 = vmatprep.subr.mxu0 0.0
    %336 = vmatpush1.msra.mxu0 0.0
    %337 = vmatprep.subr.mxu0 0.0
    %338 = vmatpush1.msra.mxu0 0.0
    %339 = vmatprep.subr.mxu0 0.0
    %340 = vmatpush1.msra.mxu0 0.0
    %341 = vmatprep.subr.mxu0 0.0
    %342 = vmatpush1.msra.mxu0 0.0
    %343 = vmatprep.subr.mxu0 0.0
    %344 = vmatpush1.msra.mxu0 0.0
    %345 = vmatprep.subr.mxu0 0.0
    %346 = vmatpush1.msra.mxu0 0.0
    %347 = vmatprep.subr.mxu0 0.0
    %348 = vmatpush1.msra.mxu0 0.0
    %349 = vmatprep.subr.mxu0 0.0
    %350 = vmatpush1.msra.mxu0 0.0
    %351 = vmatprep.subr.mxu0 0.0
    %352 = vmatpush1.msra.mxu0 0.0
    %353 = vmatprep.mubr.f32.mxu0 0.0
    %v354 = vand.u32 %v51, 4294901760
    %v355 = vsub.f32 %v51, %v354
    %v356 = vand.u32 %v355, 4294901760
    %357 = vmatmul.mubr.f32.gmra.mrb[0].mxu0 %v356
    %v358 = vpop.f32.mrb[0].mxu0
    %v359 = vadd.f32 %v284, %v358
    %v360 = vpop.f32.mrb[0].mxu0
    %361 = vdwg.mxu0
    %362 = vmatprep.subr.mxu0 0.0
    %v363 = vand.u32 %v42, 4294901760
    %v364 = vsub.f32 %v42, %v363
    %v365 = vand.u32 %v364, 4294901760
    %366 = vmatpush1.msra.mxu0 %v365
    %367 = vmatprep.subr.mxu0 0.0
    %v368 = vand.u32 %v43, 4294901760
    %v369 = vsub.f32 %v43, %v368
    %v370 = vand.u32 %v369, 4294901760
    %371 = vmatpush1.msra.mxu0 %v370
    %372 = vmatprep.subr.mxu0 0.0
    %373 = vmatpush1.msra.mxu0 0.0
    %374 = vmatprep.subr.mxu0 0.0
    %375 = vmatpush1.msra.mxu0 0.0
    %376 = vmatprep.subr.mxu0 0.0
    %377 = vmatpush1.msra.mxu0 0.0
    %378 = vmatprep.subr.mxu0 0.0
    %379 = vmatpush1.msra.mxu0 0.0
    %380 = vmatprep.subr.mxu0 0.0
    %381 = vmatpush1.msra.mxu0 0.0
    %382 = vmatprep.subr.mxu0 0.0
    %383 = vmatpush1.msra.mxu0 0.0
    %384 = vmatprep.subr.mxu0 0.0
    %385 = vmatpush1.msra.mxu0 0.0
    %386 = vmatprep.subr.mxu0 0.0
    %387 = vmatpush1.msra.mxu0 0.0
    %388 = vmatprep.subr.mxu0 0.0
    %389 = vmatpush1.msra.mxu0 0.0
    %390 = vmatprep.subr.mxu0 0.0
    %391 = vmatpush1.msra.mxu0 0.0
    %392 = vmatprep.subr.mxu0 0.0
    %393 = vmatpush1.msra.mxu0 0.0
    %394 = vmatprep.subr.mxu0 0.0
    %395 = vmatpush1.msra.mxu0 0.0
    %396 = vmatprep.subr.mxu0 0.0
    %397 = vmatpush1.msra.mxu0 0.0
    %398 = vmatprep.subr.mxu0 0.0
    %399 = vmatpush1.msra.mxu0 0.0
    %400 = vmatprep.subr.mxu0 0.0
    %401 = vmatpush1.msra.mxu0 0.0
    %402 = vmatprep.subr.mxu0 0.0
    %403 = vmatpush1.msra.mxu0 0.0
    %404 = vmatprep.subr.mxu0 0.0
    %405 = vmatpush1.msra.mxu0 0.0
    %406 = vmatprep.subr.mxu0 0.0
    %407 = vmatpush1.msra.mxu0 0.0
    %408 = vmatprep.subr.mxu0 0.0
    %409 = vmatpush1.msra.mxu0 0.0
    %410 = vmatprep.subr.mxu0 0.0
    %411 = vmatpush1.msra.mxu0 0.0
    %412 = vmatprep.subr.mxu0 0.0
    %413 = vmatpush1.msra.mxu0 0.0
    %414 = vmatprep.subr.mxu0 0.0
    %415 = vmatpush1.msra.mxu0 0.0
    %416 = vmatprep.subr.mxu0 0.0
    %417 = vmatpush1.msra.mxu0 0.0
    %418 = vmatprep.subr.mxu0 0.0
    %419 = vmatpush1.msra.mxu0 0.0
    %420 = vmatprep.subr.mxu0 0.0
    %421 = vmatpush1.msra.mxu0 0.0
    %422 = vmatprep.subr.mxu0 0.0
    %423 = vmatpush1.msra.mxu0 0.0
    %424 = vmatprep.subr.mxu0 0.0
    %425 = vmatpush1.msra.mxu0 0.0
    %426 = vmatprep.subr.mxu0 0.0
    %427 = vmatpush1.msra.mxu0 0.0
    %428 = vmatprep.subr.mxu0 0.0
    %429 = vmatpush1.msra.mxu0 0.0
    %430 = vmatprep.subr.mxu0 0.0
    %431 = vmatpush1.msra.mxu0 0.0
    %432 = vmatprep.mubr.f32.mxu0 0.0
    %v433 = vand.u32 %v51, 4294901760
    %434 = vmatmul.mubr.f32.gmra.mrb[0].mxu0 %v433
    %v435 = vpop.f32.mrb[0].mxu0
    %v436 = vadd.f32 %v359, %v435
    %v437 = vpop.f32.mrb[0].mxu0
    %438 = vdwg.mxu0
    %439 = vmatprep.subr.mxu0 0.0
    %v440 = vand.u32 %v42, 4294901760
    %441 = vmatpush1.msra.mxu0 %v440
    %442 = vmatprep.subr.mxu0 0.0
    %v443 = vand.u32 %v43, 4294901760
    %444 = vmatpush1.msra.mxu0 %v443
    %445 = vmatprep.subr.mxu0 0.0
    %446 = vmatpush1.msra.mxu0 0.0
    %447 = vmatprep.subr.mxu0 0.0
    %448 = vmatpush1.msra.mxu0 0.0
    %449 = vmatprep.subr.mxu0 0.0
    %450 = vmatpush1.msra.mxu0 0.0
    %451 = vmatprep.subr.mxu0 0.0
    %452 = vmatpush1.msra.mxu0 0.0
    %453 = vmatprep.subr.mxu0 0.0
    %454 = vmatpush1.msra.mxu0 0.0
    %455 = vmatprep.subr.mxu0 0.0
    %456 = vmatpush1.msra.mxu0 0.0
    %457 = vmatprep.subr.mxu0 0.0
    %458 = vmatpush1.msra.mxu0 0.0
    %459 = vmatprep.subr.mxu0 0.0
    %460 = vmatpush1.msra.mxu0 0.0
    %461 = vmatprep.subr.mxu0 0.0
    %462 = vmatpush1.msra.mxu0 0.0
    %463 = vmatprep.subr.mxu0 0.0
    %464 = vmatpush1.msra.mxu0 0.0
    %465 = vmatprep.subr.mxu0 0.0
    %466 = vmatpush1.msra.mxu0 0.0
    %467 = vmatprep.subr.mxu0 0.0
    %468 = vmatpush1.msra.mxu0 0.0
    %469 = vmatprep.subr.mxu0 0.0
    %470 = vmatpush1.msra.mxu0 0.0
    %471 = vmatprep.subr.mxu0 0.0
    %472 = vmatpush1.msra.mxu0 0.0
    %473 = vmatprep.subr.mxu0 0.0
    %474 = vmatpush1.msra.mxu0 0.0
    %475 = vmatprep.subr.mxu0 0.0
    %476 = vmatpush1.msra.mxu0 0.0
    %477 = vmatprep.subr.mxu0 0.0
    %478 = vmatpush1.msra.mxu0 0.0
    %479 = vmatprep.subr.mxu0 0.0
    %480 = vmatpush1.msra.mxu0 0.0
    %481 = vmatprep.subr.mxu0 0.0
    %482 = vmatpush1.msra.mxu0 0.0
    %483 = vmatprep.subr.mxu0 0.0
    %484 = vmatpush1.msra.mxu0 0.0
    %485 = vmatprep.subr.mxu0 0.0
    %486 = vmatpush1.msra.mxu0 0.0
    %487 = vmatprep.subr.mxu0 0.0
    %488 = vmatpush1.msra.mxu0 0.0
    %489 = vmatprep.subr.mxu0 0.0
    %490 = vmatpush1.msra.mxu0 0.0
    %491 = vmatprep.subr.mxu0 0.0
    %492 = vmatpush1.msra.mxu0 0.0
    %493 = vmatprep.subr.mxu0 0.0
    %494 = vmatpush1.msra.mxu0 0.0
    %495 = vmatprep.subr.mxu0 0.0
    %496 = vmatpush1.msra.mxu0 0.0
    %497 = vmatprep.subr.mxu0 0.0
    %498 = vmatpush1.msra.mxu0 0.0
    %499 = vmatprep.subr.mxu0 0.0
    %500 = vmatpush1.msra.mxu0 0.0
    %501 = vmatprep.subr.mxu0 0.0
    %502 = vmatpush1.msra.mxu0 0.0
    %503 = vmatprep.subr.mxu0 0.0
    %504 = vmatpush1.msra.mxu0 0.0
    %505 = vmatprep.mubr.f32.mxu0 0.0
    %v506 = vand.u32 %v51, 4294901760
    %507 = vmatmul.mubr.f32.gmra.mrb[0].mxu0 %v506
    %v508 = vpop.f32.mrb[0].mxu0
    %v509 = vadd.f32 %v436, %v508
    %v510 = vpop.f32.mrb[0].mxu0
    %511 = vdwg.mxu0
    %v512 = vld [vmem:[%s2 + $0x1] sm:$0x1]
    %vm513 = vcmp.gt.f32.partialorder %v512, 0.5
    %v514 = vand.u32 2147483647, %v509
    %vm515 = vcmp.le.f32.partialorder %v514, 0.7853982
    %vm516 = vcmp.lt.s32.totalorder %v509, 0
    %v517 = vand.u32 %v509, 2139095040
    %v518 = vshrl.u32 %v517, 23
    %v519 = vsub.s32 %v518, 127
    %v520 = vand.u32 2147483647, %v509
    %v521 = vand.u32 %v520, 8388607
    %v522 = vor.u32 %v521, 8388608
    %v523 = vsub.s32 0, %v522
    %v524 = vadd.s32 %v519, 1
    %vm525 = vcmp.gt.s32.totalorder %v524, 0
    %v526 = vsel %vm525, %v524, 0
    %v527 = vshrl.u32 %v526, 5
    %v528 = vand.u32 %v526, 31
    %v529 = vsub.s32 32, %v528
    %v530 = vshrl.u32 683565275, %v529
    %v531 = vshll.u32 683565275, %v528
    %v532 = vshrl.u32 2475754826, %v529
    %v533 = vor.u32 %v531, %v532
    %v534 = vshll.u32 2475754826, %v528
    %v535 = vshrl.u32 2131351028, %v529
    %v536 = vor.u32 %v534, %v535
    %v537 = vshll.u32 2131351028, %v528
    %v538 = vshrl.u32 2102212464, %v529
    %v539 = vor.u32 %v537, %v538
    %v540 = vshll.u32 2102212464, %v528
    %v541 = vshrl.u32 920167782, %v529
    %v542 = vor.u32 %v540, %v541
    %v543 = vshll.u32 920167782, %v528
    %v544 = vshrl.u32 1326507024, %v529
    %v545 = vor.u32 %v543, %v544
    %vm546 = vcmp.lt.s32.totalorder %v527, 1
    %vm547 = vcmp.lt.s32.totalorder %v527, 2
    %vm548 = vcmp.lt.s32.totalorder %v527, 3
    %vm549 = vcmp.lt.s32.totalorder %v527, 4
    %v550 = vsel %vm546, %v530, %v533
    %v551 = vsel %vm549, %v539, 2102212464
    %v552 = vsel %vm548, %v536, %v551
    %v553 = vsel %vm547, %v550, %v552
    %v554 = vsel %vm546, %v533, %v536
    %v555 = vsel %vm549, %v542, 920167782
    %v556 = vsel %vm548, %v539, %v555
    %v557 = vsel %vm547, %v554, %v556
    %v558 = vsel %vm546, %v536, %v539
    %v559 = vsel %vm549, %v545, 1326507024
    %v560 = vsel %vm548, %v542, %v559
    %v561 = vsel %vm547, %v558, %v560
    %v562 = vshll.u32 %v522, 8
    %v563 = vmul.u32.u64.compose %v562, %v561
    %v564 = vextract.low.u32 %v563
    %v565 = vextract.high.u32 %v563
    %v566 = vmul.u32.u64.compose %v562, %v557
    %v567 = vextract.low.u32 %v566
    %v568 = vextract.high.u32 %v566
    %v569 = vmul.u32 %v562, %v553
    %v570 = vadd.s32 %v565, %v567
    %vm571 = vc.u32 %v565, %v567
    %v572 = vadd.s32 %v568, 1
    %v573 = vsel %vm571, %v572, %v568
    %v574 = vadd.s32 %v569, %v573
    %v575 = vadd.s32 %v574, 536870912
    %v576 = vshrl.u32 %v575, 30
    %v577 = vshll.u32 %v576, 30
    %v578 = vsub.s32 %v574, %v577
    %vm579 = vcmp.lt.s32.totalorder %v578, 0
    %v580 = vsub.s32 0, %v578
    %v581 = vsel %vm579, %v580, %v578
    %v582 = vclz %v581
    %v583 = vsub.s32 %v582, 2
    %vm584 = vcmp.gt.s32.totalorder 0, %v583
    %v585 = vsel %vm584, 0, %v583
    %v586 = vsub.s32 32, %v585
    %v587 = vshll.u32 %v578, %v585
    %v588 = vshrl.u32 %v570, %v586
    %v589 = vor.u32 %v587, %v588
    %v590 = vsub.s32 4294967266, %v585
    %v591 = vadd.s32 %v590, 127
    %v592 = vshll.u32 %v591, 23
    %v593 = vor.u32 4788187, %v592
    %v594 = vand.u32 2147483647, %v593
    %v596 = vcvt.s32.f32 %v589
    %v597 = vmul.f32 %v596, %v594
    %v598 = vxor.u32 %v597, 2147483648
    %v599 = vsel %vm516, %v598, %v597
    %v600 = vsub.s32 4, %v576
    %v601 = vsel %vm516, %v600, %v576
    %v602 = vsel %vm515, %v509, %v599
    %v603 = vsel %vm515, 0, %v601
    %v604 = vcosq.f32.pop %v602
    %v605 = vsinq.f32.pop %v602
    %vm606 = vweird.f32 %v509
    %v607 = vadd.s32 %v603, 3
    %v608 = vand.u32 %v607, 3
    %vm609 = vcmp.lt.s32.totalorder %v608, 2
    %vm610 = vcmp.eq.s32.totalorder %v608, 0
    %v611 = vxor.u32 %v605, 2147483648
    %v612 = vsel %vm610, %v604, %v611
    %vm613 = vcmp.eq.s32.totalorder %v608, 2
    %v614 = vxor.u32 %v604, 2147483648
    %v615 = vsel %vm613, %v614, %v605
    %v616 = vsel %vm609, %v612, %v615
    %v617 = vsel %vm606, nan, %v616
    %v618 = vsel %vm513, 1, 0
    %v619 = vlaneseq
    %v620 = vshrl.u32 %v619, 7
    %v621 = vsub.s32 0, %v620
    %v622 = vrot.slane %v618, %v621
    %vm623 = vcmp.eq.s32.totalorder %v622, 1
    %v624 = vsel %vm623, %v509, %v617
    %625 = vst [vmem:[#allocation7] sm:$0xff] %v624
    // Predicated region
    $region22: #{tpu_custom_call.1} parent=1 // pred_check
      _
    $region23: #{tpu_custom_call.1} parent=1 // pred_check_branch
      %627 = sbr.rel (0) target = $region25
    $region24: #{tpu_custom_call.1} parent=1 // pred_region
      %s629 = ssub.s32 128, 128
      %630 = vsyncadd [#allocation4], %s629
      %s632 = sshll.u32 [#allocation7], 4
      %s633 = int_to_ptr.vmem [resolvable:$true] %s632
      %635 = dma.vmem_to_hbm [thread:$0]  %s633, 128, %s3, [#allocation4]
    $region25: #{tpu_custom_call.1} parent=1 // pred_fallthru
      _
    // Predicated region
    $region26: #{tpu_custom_call.1} parent=1 // pred_check
      _
    $region27: #{tpu_custom_call.1} parent=1 // pred_check_branch
      %637 = sbr.rel (0) target = $region29
    $region28: #{tpu_custom_call.1} parent=1 // pred_region
      %638 = dma.done [#allocation4], 128
    $region29: #{tpu_custom_call.1} parent=1 // pred_fallthru
      _
    %639 = vsyncpa [#allocation3], 1
    %640 = vsyncpa [#allocation6], 1
    %641 = vsyncpa [#allocation4], 1

</llo_original>
